<compile_context>
chip_gen: v5e
topology: v5e:2x2
jax: 0.10.0
libtpu: 0.0.40
codegen_flags: <defaults>
</compile_context>

<pallas_src>
import jax
import jax.numpy as jnp
from jax.experimental import pallas as pl
from jax.experimental.pallas import tpu as pltpu

LANES = 128  # lane width of the vreg; feature dims are padded to this


def sage3_fused_kernel(x_ref, a1_ref, a2_ref, a3_ref,
                       wn1_ref, ws1_ref, b1_ref,
                       wn2_ref, ws2_ref, b2_ref,
                       wn3_ref, ws3_ref, b3_ref,
                       o_ref):
    """Fused 3-layer SAGEConv('mean') forward. Everything stays in VMEM/vregs."""

    def layer(a, xin, wn, ws, b, apply_relu):
        n_dst = a.shape[0]  # DGL block: dst nodes are the first n_dst src rows
        # Hoist the dst-invariant contraction: A @ (x @ W_neigh)
        xw = jnp.dot(xin, wn, preferred_element_type=jnp.float32).astype(jnp.bfloat16)
        out = (jnp.dot(a, xw, preferred_element_type=jnp.float32)
               + jnp.dot(xin[:n_dst], ws, preferred_element_type=jnp.float32)
               + b)
        if apply_relu:
            out = jnp.maximum(out, 0.0)
        return out

    h = x_ref[...]
    h = layer(a1_ref[...], h, wn1_ref[...], ws1_ref[...], b1_ref[...], True)
    # TODO(synk): nn.Dropout(0.5) is identity in eval mode; training-mode RNG dropout omitted.
    h = layer(a2_ref[...], h.astype(jnp.bfloat16), wn2_ref[...], ws2_ref[...], b2_ref[...], True)
    h = layer(a3_ref[...], h.astype(jnp.bfloat16), wn3_ref[...], ws3_ref[...], b3_ref[...], False)
    o_ref[...] = h  # f32, lane-dense (padded to 128 lanes)


def _pad2d(arr, rows, cols):
    r, c = arr.shape
    return jnp.pad(arr, ((0, rows - r), (0, cols - c)))


@jax.jit
def sage_forward(params, blocks, x):
    """Forward pass of the SAGE module (3 layers, ReLU + dropout between layers).

    params : [(w_neigh [f_in,f_out], w_self [f_in,f_out], bias [f_out])] * 3
    blocks : [A_mean [n_dst, n_src]] * 3  (row-normalized mean-aggregation matrices)
    x      : [n_src_0, in_size] float32 src node features of the first block
    """
    assert len(params) == 3 and len(blocks) == 3
    out_size = params[-1][0].shape[1]
    n_dst_last = blocks[-1].shape[0]

    # bf16 MXU inputs; feature axes zero-padded to the 128-lane width (zero pad is exact:
    # padded x columns hit zero-padded weight rows, padded output columns get zero bias).
    xb = _pad2d(x, x.shape[0], LANES).astype(jnp.bfloat16)
    a_args = [a.astype(jnp.bfloat16) for a in blocks]
    w_args = []
    for (w_neigh, w_self, bias) in params:
        w_args.append(_pad2d(w_neigh, LANES, LANES).astype(jnp.bfloat16))
        w_args.append(_pad2d(w_self, LANES, LANES).astype(jnp.bfloat16))
        w_args.append(_pad2d(bias.reshape(1, -1), 1, LANES).astype(jnp.float32))

    vmem = pl.BlockSpec(memory_space=pltpu.MemorySpace.VMEM)
    out = pl.pallas_call(
        sage3_fused_kernel,
        out_shape=jax.ShapeDtypeStruct((n_dst_last, LANES), jnp.float32),
        in_specs=[vmem] * (1 + len(a_args) + len(w_args)),
        out_specs=vmem,
    )(xb, *a_args, *w_args)
    return out[:, :out_size]


def sage_forward_reference(params, blocks, x):
    """Pure-JAX f32 reference of the module semantics."""
    hidden_x = x
    n_layers = len(params)
    for layer_idx, ((w_neigh, w_self, bias), a) in enumerate(zip(params, blocks)):
        n_dst = a.shape[0]
        h_neigh = a @ hidden_x
        out = hidden_x[:n_dst] @ w_self + h_neigh @ w_neigh + bias[None, :]
        if layer_idx != n_layers - 1:
            out = jnp.maximum(out, 0.0)
        hidden_x = out
    return hidden_x


def make_mean_agg_matrix(key, n_dst, n_src):
    """Random bipartite block -> dense row-normalized mean-aggregation matrix."""
    # TODO(synk): for realistic graph sparsity use scalar-prefetched neighbor indices +
    # gather/segment-mean instead of a dense A (dense A is fine at these toy sizes).
    adj = jax.random.bernoulli(key, p=0.3, shape=(n_dst, n_src)).astype(jnp.float32)
    adj = adj.at[jnp.arange(n_dst), jnp.arange(n_dst)].set(1.0)  # dst prefix self-edge
    deg = jnp.clip(adj.sum(axis=1, keepdims=True), 1.0, None)
    return adj / deg


if __name__ == "__main__":
    key = jax.random.PRNGKey(0)

    in_size, hidden_size, out_size = 16, 32, 8
    # sampled-block node counts per layer (src shrinks toward the seed nodes)
    layer_sizes = [(32, 64), (16, 32), (8, 16)]  # (n_dst, n_src) per layer
    feat_dims = [(in_size, hidden_size), (hidden_size, hidden_size), (hidden_size, out_size)]

    keys = jax.random.split(key, 13)
    x = jax.random.normal(keys[0], (layer_sizes[0][1], in_size), dtype=jnp.float32)

    params = []
    for li, (f_in, f_out) in enumerate(feat_dims):
        kw, ks, kb = keys[1 + 3 * li], keys[2 + 3 * li], keys[3 + 3 * li]
        w_neigh = jax.random.normal(kw, (f_in, f_out), dtype=jnp.float32) * 0.1
        w_self = jax.random.normal(ks, (f_in, f_out), dtype=jnp.float32) * 0.1
        bias = jax.random.normal(kb, (f_out,), dtype=jnp.float32) * 0.01
        params.append((w_neigh, w_self, bias))

    blocks = []
    for li, (n_dst, n_src) in enumerate(layer_sizes):
        blocks.append(make_mean_agg_matrix(keys[10 + li], n_dst, n_src))

    out = sage_forward(params, blocks, x)
    out = jax.block_until_ready(out)

    ref = sage_forward_reference(params, blocks, x)
    assert out.shape == (layer_sizes[-1][0], out_size), out.shape
    # bf16 MXU inputs with f32 accumulation vs. an f32 reference -> bf16-level tolerance.
    assert jnp.allclose(out, ref, atol=5e-2, rtol=5e-2), "mismatch vs JAX reference"

    print("KERNEL_OK")
</pallas_src>

<mosaic_0001>
module attributes {stable_mosaic.version = 11 : i64} {
  func.func @sage3_fused_kernel(%arg0: memref<64x128xbf16, #tpu.memory_space<vmem>>, %arg1: memref<32x64xbf16, #tpu.memory_space<vmem>>, %arg2: memref<16x32xbf16, #tpu.memory_space<vmem>>, %arg3: memref<8x16xbf16, #tpu.memory_space<vmem>>, %arg4: memref<128x128xbf16, #tpu.memory_space<vmem>>, %arg5: memref<128x128xbf16, #tpu.memory_space<vmem>>, %arg6: memref<1x128xf32, #tpu.memory_space<vmem>>, %arg7: memref<128x128xbf16, #tpu.memory_space<vmem>>, %arg8: memref<128x128xbf16, #tpu.memory_space<vmem>>, %arg9: memref<1x128xf32, #tpu.memory_space<vmem>>, %arg10: memref<128x128xbf16, #tpu.memory_space<vmem>>, %arg11: memref<128x128xbf16, #tpu.memory_space<vmem>>, %arg12: memref<1x128xf32, #tpu.memory_space<vmem>>, %arg13: memref<8x128xf32, #tpu.memory_space<vmem>>) attributes {dimension_semantics = [], scalar_prefetch = 0 : i64, scratch_operands = 0 : i64, tpu.core_type = #tpu.core_type<tc>} {
    %c0 = arith.constant 0 : index
    %c0_0 = arith.constant 0 : index
    %0 = vector.load %arg0[%c0, %c0_0] : memref<64x128xbf16, #tpu.memory_space<vmem>>, vector<64x128xbf16>
    %c0_1 = arith.constant 0 : index
    %c0_2 = arith.constant 0 : index
    %1 = vector.load %arg1[%c0_1, %c0_2] : memref<32x64xbf16, #tpu.memory_space<vmem>>, vector<32x64xbf16>
    %c0_3 = arith.constant 0 : index
    %c0_4 = arith.constant 0 : index
    %2 = vector.load %arg4[%c0_3, %c0_4] : memref<128x128xbf16, #tpu.memory_space<vmem>>, vector<128x128xbf16>
    %c0_5 = arith.constant 0 : index
    %c0_6 = arith.constant 0 : index
    %3 = vector.load %arg5[%c0_5, %c0_6] : memref<128x128xbf16, #tpu.memory_space<vmem>>, vector<128x128xbf16>
    %c0_7 = arith.constant 0 : index
    %c0_8 = arith.constant 0 : index
    %4 = vector.load %arg6[%c0_7, %c0_8] : memref<1x128xf32, #tpu.memory_space<vmem>>, vector<1x128xf32>
    %cst = arith.constant dense<0.000000e+00> : vector<64x128xf32>
    %5 = tpu.matmul %0, %2, %cst {dimension_numbers = #tpu.dot_dimension_numbers<[1], [0], [0], [1], [0, 0, 1, 1], [], []>} : vector<64x128xbf16>, vector<128x128xbf16>, vector<64x128xf32> -> vector<64x128xf32>
    %6 = arith.truncf %5 : vector<64x128xf32> to vector<64x128xbf16>
    %cst_9 = arith.constant dense<0.000000e+00> : vector<32x128xf32>
    %7 = tpu.matmul %1, %6, %cst_9 {dimension_numbers = #tpu.dot_dimension_numbers<[1], [0], [0], [1], [0, 0, 1, 1], [], []>} : vector<32x64xbf16>, vector<64x128xbf16>, vector<32x128xf32> -> vector<32x128xf32>
    %8 = vector.extract_strided_slice %0 {offsets = [0, 0], sizes = [32, 128], strides = [1, 1]} : vector<64x128xbf16> to vector<32x128xbf16>
    %cst_10 = arith.constant dense<0.000000e+00> : vector<32x128xf32>
    %9 = tpu.matmul %8, %3, %cst_10 {dimension_numbers = #tpu.dot_dimension_numbers<[1], [0], [0], [1], [0, 0, 1, 1], [], []>} : vector<32x128xbf16>, vector<128x128xbf16>, vector<32x128xf32> -> vector<32x128xf32>
    %10 = arith.addf %7, %9 : vector<32x128xf32>
    %11 = vector.broadcast %4 : vector<1x128xf32> to vector<32x128xf32>
    %12 = arith.addf %10, %11 : vector<32x128xf32>
    %cst_11 = arith.constant 0.000000e+00 : f32
    %13 = vector.broadcast %cst_11 : f32 to vector<32x128xf32>
    %14 = arith.maximumf %12, %13 : vector<32x128xf32>
    %c0_12 = arith.constant 0 : index
    %c0_13 = arith.constant 0 : index
    %15 = vector.load %arg2[%c0_12, %c0_13] : memref<16x32xbf16, #tpu.memory_space<vmem>>, vector<16x32xbf16>
    %16 = arith.truncf %14 : vector<32x128xf32> to vector<32x128xbf16>
    %c0_14 = arith.constant 0 : index
    %c0_15 = arith.constant 0 : index
    %17 = vector.load %arg7[%c0_14, %c0_15] : memref<128x128xbf16, #tpu.memory_space<vmem>>, vector<128x128xbf16>
    %c0_16 = arith.constant 0 : index
    %c0_17 = arith.constant 0 : index
    %18 = vector.load %arg8[%c0_16, %c0_17] : memref<128x128xbf16, #tpu.memory_space<vmem>>, vector<128x128xbf16>
    %c0_18 = arith.constant 0 : index
    %c0_19 = arith.constant 0 : index
    %19 = vector.load %arg9[%c0_18, %c0_19] : memref<1x128xf32, #tpu.memory_space<vmem>>, vector<1x128xf32>
    %cst_20 = arith.constant dense<0.000000e+00> : vector<32x128xf32>
    %20 = tpu.matmul %16, %17, %cst_20 {dimension_numbers = #tpu.dot_dimension_numbers<[1], [0], [0], [1], [0, 0, 1, 1], [], []>} : vector<32x128xbf16>, vector<128x128xbf16>, vector<32x128xf32> -> vector<32x128xf32>
    %21 = arith.truncf %20 : vector<32x128xf32> to vector<32x128xbf16>
    %cst_21 = arith.constant dense<0.000000e+00> : vector<16x128xf32>
    %22 = tpu.matmul %15, %21, %cst_21 {dimension_numbers = #tpu.dot_dimension_numbers<[1], [0], [0], [1], [0, 0, 1, 1], [], []>} : vector<16x32xbf16>, vector<32x128xbf16>, vector<16x128xf32> -> vector<16x128xf32>
    %23 = vector.extract_strided_slice %16 {offsets = [0, 0], sizes = [16, 128], strides = [1, 1]} : vector<32x128xbf16> to vector<16x128xbf16>
    %cst_22 = arith.constant dense<0.000000e+00> : vector<16x128xf32>
    %24 = tpu.matmul %23, %18, %cst_22 {dimension_numbers = #tpu.dot_dimension_numbers<[1], [0], [0], [1], [0, 0, 1, 1], [], []>} : vector<16x128xbf16>, vector<128x128xbf16>, vector<16x128xf32> -> vector<16x128xf32>
    %25 = arith.addf %22, %24 : vector<16x128xf32>
    %26 = vector.broadcast %19 : vector<1x128xf32> to vector<16x128xf32>
    %27 = arith.addf %25, %26 : vector<16x128xf32>
    %cst_23 = arith.constant 0.000000e+00 : f32
    %28 = vector.broadcast %cst_23 : f32 to vector<16x128xf32>
    %29 = arith.maximumf %27, %28 : vector<16x128xf32>
    %c0_24 = arith.constant 0 : index
    %c0_25 = arith.constant 0 : index
    %30 = vector.load %arg3[%c0_24, %c0_25] : memref<8x16xbf16, #tpu.memory_space<vmem>>, vector<8x16xbf16>
    %31 = arith.truncf %29 : vector<16x128xf32> to vector<16x128xbf16>
    %c0_26 = arith.constant 0 : index
    %c0_27 = arith.constant 0 : index
    %32 = vector.load %arg10[%c0_26, %c0_27] : memref<128x128xbf16, #tpu.memory_space<vmem>>, vector<128x128xbf16>
    %c0_28 = arith.constant 0 : index
    %c0_29 = arith.constant 0 : index
    %33 = vector.load %arg11[%c0_28, %c0_29] : memref<128x128xbf16, #tpu.memory_space<vmem>>, vector<128x128xbf16>
    %c0_30 = arith.constant 0 : index
    %c0_31 = arith.constant 0 : index
    %34 = vector.load %arg12[%c0_30, %c0_31] : memref<1x128xf32, #tpu.memory_space<vmem>>, vector<1x128xf32>
    %cst_32 = arith.constant dense<0.000000e+00> : vector<16x128xf32>
    %35 = tpu.matmul %31, %32, %cst_32 {dimension_numbers = #tpu.dot_dimension_numbers<[1], [0], [0], [1], [0, 0, 1, 1], [], []>} : vector<16x128xbf16>, vector<128x128xbf16>, vector<16x128xf32> -> vector<16x128xf32>
    %36 = arith.truncf %35 : vector<16x128xf32> to vector<16x128xbf16>
    %cst_33 = arith.constant dense<0.000000e+00> : vector<8x128xf32>
    %37 = tpu.matmul %30, %36, %cst_33 {dimension_numbers = #tpu.dot_dimension_numbers<[1], [0], [0], [1], [0, 0, 1, 1], [], []>} : vector<8x16xbf16>, vector<16x128xbf16>, vector<8x128xf32> -> vector<8x128xf32>
    %38 = vector.extract_strided_slice %31 {offsets = [0, 0], sizes = [8, 128], strides = [1, 1]} : vector<16x128xbf16> to vector<8x128xbf16>
    %cst_34 = arith.constant dense<0.000000e+00> : vector<8x128xf32>
    %39 = tpu.matmul %38, %33, %cst_34 {dimension_numbers = #tpu.dot_dimension_numbers<[1], [0], [0], [1], [0, 0, 1, 1], [], []>} : vector<8x128xbf16>, vector<128x128xbf16>, vector<8x128xf32> -> vector<8x128xf32>
    %40 = arith.addf %37, %39 : vector<8x128xf32>
    %41 = vector.broadcast %34 : vector<1x128xf32> to vector<8x128xf32>
    %42 = arith.addf %40, %41 : vector<8x128xf32>
    %c0_35 = arith.constant 0 : index
    %c0_36 = arith.constant 0 : index
    %43 = vector.load %arg13[%c0_35, %c0_36] : memref<8x128xf32, #tpu.memory_space<vmem>>, vector<8x128xf32>
    tpu.vector_store %arg13[%c0_35, %c0_36], %42 {strides = array<i32>} : memref<8x128xf32, #tpu.memory_space<vmem>>, vector<8x128xf32>,
    return
  }
}

</mosaic_0001>

<llo_original>
// kernel: sage_forward.1
$region0: #{sage_forward.1}
  #allocation0 [shape = 'u32[]', space=smem, size = 0x4, offset = 0x4, fixed_abs, tag = 'smem constant byte address 0x4 - core index']
  #allocation1 [shape = 'u32[72,128]{1,0:T(1,128)}', space=vmem, size = 0x9000, scoped, tag = 'internal scratch']
  %s0 = inlined_call_operand.vmem [shape: bf16[64,128], index: 0, kind: input, shape index: {}]
  %s1 = inlined_call_operand.vmem [shape: bf16[32,64], index: 1, kind: input, shape index: {}]
  %s2 = inlined_call_operand.vmem [shape: bf16[16,32], index: 2, kind: input, shape index: {}]
  %s3 = inlined_call_operand.vmem [shape: bf16[8,16], index: 3, kind: input, shape index: {}]
  %s4 = inlined_call_operand.vmem [shape: bf16[128,128], index: 4, kind: input, shape index: {}]
  %s5 = inlined_call_operand.vmem [shape: bf16[128,128], index: 5, kind: input, shape index: {}]
  %s6 = inlined_call_operand.vmem [shape: f32[1,128], index: 6, kind: input, shape index: {}]
  %s7 = inlined_call_operand.vmem [shape: bf16[128,128], index: 7, kind: input, shape index: {}]
  %s8 = inlined_call_operand.vmem [shape: bf16[128,128], index: 8, kind: input, shape index: {}]
  %s9 = inlined_call_operand.vmem [shape: f32[1,128], index: 9, kind: input, shape index: {}]
  %s10 = inlined_call_operand.vmem [shape: bf16[128,128], index: 10, kind: input, shape index: {}]
  %s11 = inlined_call_operand.vmem [shape: bf16[128,128], index: 11, kind: input, shape index: {}]
  %s12 = inlined_call_operand.vmem [shape: f32[1,128], index: 12, kind: input, shape index: {}]
  %s13 = inlined_call_operand.hbm [shape: f32[8,128], index: 13, kind: output, shape index: {}]
  %s14 = sld [smem:[#allocation0]]
  $region62: #{sage_forward.1} parent=0
    _
  %s16 = ssub.s32 1, %s14
  %s17 = scalar_select 0, %s16, %s14
  $region1: #{sage_forward.1} parent=0
    #allocation2 [shape = 'u8[4096]{0}', space=vmem, size = 0x1000, scoped, tag = 'output window, operand 0, single buffered']
    #allocation3 [shape = 's32[1]{0}', space=sflag, size = 0x4, scoped, tag = 'scoped memory for sage_forward.1']
    %18 = vsyncpa [#allocation3], 0
    // Predicated region
    $region2: #{sage_forward.1} parent=1 // pred_check
      _
    $region3: #{sage_forward.1} parent=1 // pred_check_branch
      %20 = sbr.rel (0) target = $region5
    $region4: #{sage_forward.1} parent=1 // pred_region
      _
    $region5: #{sage_forward.1} parent=1 // pred_fallthru
      _
    // Predicated region
    $region6: #{sage_forward.1} parent=1 // pred_check
      _
    $region7: #{sage_forward.1} parent=1 // pred_check_branch
      %22 = sbr.rel (0) target = $region9
    $region8: #{sage_forward.1} parent=1 // pred_region
      _
    $region9: #{sage_forward.1} parent=1 // pred_fallthru
      _
    // Predicated region
    $region10: #{sage_forward.1} parent=1 // pred_check
      _
    $region11: #{sage_forward.1} parent=1 // pred_check_branch
      %24 = sbr.rel (0) target = $region13
    $region12: #{sage_forward.1} parent=1 // pred_region
      _
    $region13: #{sage_forward.1} parent=1 // pred_fallthru
      _
    // Predicated region
    $region14: #{sage_forward.1} parent=1 // pred_check
      _
    $region15: #{sage_forward.1} parent=1 // pred_check_branch
      %26 = sbr.rel (0) target = $region17
    $region16: #{sage_forward.1} parent=1 // pred_region
      _
    $region17: #{sage_forward.1} parent=1 // pred_fallthru
      _
    // Predicated region
    $region18: #{sage_forward.1} parent=1 // pred_check
      _
    $region19: #{sage_forward.1} parent=1 // pred_check_branch
      %28 = sbr.rel (0) target = $region21
    $region20: #{sage_forward.1} parent=1 // pred_region
      _
    $region21: #{sage_forward.1} parent=1 // pred_fallthru
      _
    // Predicated region
    $region22: #{sage_forward.1} parent=1 // pred_check
      _
    $region23: #{sage_forward.1} parent=1 // pred_check_branch
      %30 = sbr.rel (0) target = $region25
    $region24: #{sage_forward.1} parent=1 // pred_region
      _
    $region25: #{sage_forward.1} parent=1 // pred_fallthru
      _
    // Predicated region
    $region26: #{sage_forward.1} parent=1 // pred_check
      _
    $region27: #{sage_forward.1} parent=1 // pred_check_branch
      %32 = sbr.rel (0) target = $region29
    $region28: #{sage_forward.1} parent=1 // pred_region
      _
    $region29: #{sage_forward.1} parent=1 // pred_fallthru
      _
    // Predicated region
    $region30: #{sage_forward.1} parent=1 // pred_check
      _
    $region31: #{sage_forward.1} parent=1 // pred_check_branch
      %34 = sbr.rel (0) target = $region33
    $region32: #{sage_forward.1} parent=1 // pred_region
      _
    $region33: #{sage_forward.1} parent=1 // pred_fallthru
      _
    // Predicated region
    $region34: #{sage_forward.1} parent=1 // pred_check
      _
    $region35: #{sage_forward.1} parent=1 // pred_check_branch
      %36 = sbr.rel (0) target = $region37
    $region36: #{sage_forward.1} parent=1 // pred_region
      _
    $region37: #{sage_forward.1} parent=1 // pred_fallthru
      _
    // Predicated region
    $region38: #{sage_forward.1} parent=1 // pred_check
      _
    $region39: #{sage_forward.1} parent=1 // pred_check_branch
      %38 = sbr.rel (0) target = $region41
    $region40: #{sage_forward.1} parent=1 // pred_region
      _
    $region41: #{sage_forward.1} parent=1 // pred_fallthru
      _
    // Predicated region
    $region42: #{sage_forward.1} parent=1 // pred_check
      _
    $region43: #{sage_forward.1} parent=1 // pred_check_branch
      %40 = sbr.rel (0) target = $region45
    $region44: #{sage_forward.1} parent=1 // pred_region
      _
    $region45: #{sage_forward.1} parent=1 // pred_fallthru
      _
    // Predicated region
    $region46: #{sage_forward.1} parent=1 // pred_check
      _
    $region47: #{sage_forward.1} parent=1 // pred_check_branch
      %42 = sbr.rel (0) target = $region49
    $region48: #{sage_forward.1} parent=1 // pred_region
      _
    $region49: #{sage_forward.1} parent=1 // pred_fallthru
      _
    // Predicated region
    $region50: #{sage_forward.1} parent=1 // pred_check
      _
    $region51: #{sage_forward.1} parent=1 // pred_check_branch
      %44 = sbr.rel (0) target = $region53
    $region52: #{sage_forward.1} parent=1 // pred_region
      _
    $region53: #{sage_forward.1} parent=1 // pred_fallthru
      _
    %v46 = vld [vmem:[%s0] sm:$0xf]
    %v47 = vld [vmem:[%s0 + $0x4] sm:$0xf]
    %v48 = vld [vmem:[%s0 + $0x8] sm:$0xf]
    %v49 = vld [vmem:[%s0 + $0xc] sm:$0xf]
    %v50 = vld [vmem:[%s0 + $0x10] sm:$0xf]
    %v51 = vld [vmem:[%s0 + $0x14] sm:$0xf]
    %v52 = vld [vmem:[%s0 + $0x18] sm:$0xf]
    %v53 = vld [vmem:[%s0 + $0x1c] sm:$0xf]
    %v54 = vld [vmem:[%s1] sm:$0xf]
    %v55 = vld [vmem:[%s1 + $0x4] sm:$0xf]
    %v56 = vld [vmem:[%s1 + $0x8] sm:$0xf]
    %v57 = vld [vmem:[%s1 + $0xc] sm:$0xf]
    %v58 = vld [vmem:[%s4] sm:$0xf]
    %v59 = vld [vmem:[%s4 + $0x4] sm:$0xf]
    %v60 = vld [vmem:[%s4 + $0x8] sm:$0xf]
    %v61 = vld [vmem:[%s4 + $0xc] sm:$0xf]
    %v62 = vld [vmem:[%s4 + $0x10] sm:$0xf]
    %v63 = vld [vmem:[%s4 + $0x14] sm:$0xf]
    %v64 = vld [vmem:[%s4 + $0x18] sm:$0xf]
    %v65 = vld [vmem:[%s4 + $0x1c] sm:$0xf]
    %v66 = vld [vmem:[%s4 + $0x20] sm:$0xf]
    %v67 = vld [vmem:[%s4 + $0x24] sm:$0xf]
    %v68 = vld [vmem:[%s4 + $0x28] sm:$0xf]
    %v69 = vld [vmem:[%s4 + $0x2c] sm:$0xf]
    %v70 = vld [vmem:[%s4 + $0x30] sm:$0xf]
    %v71 = vld [vmem:[%s4 + $0x34] sm:$0xf]
    %v72 = vld [vmem:[%s4 + $0x38] sm:$0xf]
    %v73 = vld [vmem:[%s4 + $0x3c] sm:$0xf]
    %v74 = vld [vmem:[%s5] sm:$0xf]
    %v75 = vld [vmem:[%s5 + $0x4] sm:$0xf]
    %v76 = vld [vmem:[%s5 + $0x8] sm:$0xf]
    %v77 = vld [vmem:[%s5 + $0xc] sm:$0xf]
    %v78 = vld [vmem:[%s5 + $0x10] sm:$0xf]
    %v79 = vld [vmem:[%s5 + $0x14] sm:$0xf]
    %v80 = vld [vmem:[%s5 + $0x18] sm:$0xf]
    %v81 = vld [vmem:[%s5 + $0x1c] sm:$0xf]
    %v82 = vld [vmem:[%s5 + $0x20] sm:$0xf]
    %v83 = vld [vmem:[%s5 + $0x24] sm:$0xf]
    %v84 = vld [vmem:[%s5 + $0x28] sm:$0xf]
    %v85 = vld [vmem:[%s5 + $0x2c] sm:$0xf]
    %v86 = vld [vmem:[%s5 + $0x30] sm:$0xf]
    %v87 = vld [vmem:[%s5 + $0x34] sm:$0xf]
    %v88 = vld [vmem:[%s5 + $0x38] sm:$0xf]
    %v89 = vld [vmem:[%s5 + $0x3c] sm:$0xf]
    %v90 = vld [vmem:[%s6] sm:$0x1]
    %v99 = vunpack.c.l.b16 %v46
    %v100 = vunpack.c.l.b16 %v47
    %v101 = vunpack.c.l.b16 %v48
    %v102 = vunpack.c.l.b16 %v49
    %v103 = vunpack.c.l.b16 %v50
    %v104 = vunpack.c.l.b16 %v51
    %v105 = vunpack.c.l.b16 %v52
    %v106 = vunpack.c.l.b16 %v53
    %v107 = vpack.c.b16 %v100, %v99
    %v108 = vpack.c.b16 %v102, %v101
    %v109 = vpack.c.b16 %v104, %v103
    %v110 = vpack.c.b16 %v106, %v105
    %v131 = vunpack.c.l.b16 %v58
    %v132 = vunpack.c.l.b16 %v59
    %v133 = vunpack.c.l.b16 %v60
    %v134 = vunpack.c.l.b16 %v61
    %v135 = vunpack.c.l.b16 %v62
    %v136 = vunpack.c.l.b16 %v63
    %v137 = vunpack.c.l.b16 %v64
    %v138 = vunpack.c.l.b16 %v65
    %v139 = vunpack.c.l.b16 %v66
    %v140 = vunpack.c.l.b16 %v67
    %v141 = vunpack.c.l.b16 %v68
    %v142 = vunpack.c.l.b16 %v69
    %v143 = vunpack.c.l.b16 %v70
    %v144 = vunpack.c.l.b16 %v71
    %v145 = vunpack.c.l.b16 %v72
    %v146 = vunpack.c.l.b16 %v73
    %v147 = vpack.c.b16 %v132, %v131
    %v148 = vpack.c.b16 %v134, %v133
    %v149 = vpack.c.b16 %v136, %v135
    %v150 = vpack.c.b16 %v138, %v137
    %v151 = vpack.c.b16 %v140, %v139
    %v152 = vpack.c.b16 %v142, %v141
    %v153 = vpack.c.b16 %v144, %v143
    %v154 = vpack.c.b16 %v146, %v145
    %163 = vmatpush.bf16.msra.mxu0 %v154
    %164 = vmatpush.bf16.msra.mxu0 %v153
    %165 = vmatpush.bf16.msra.mxu0 %v152
    %166 = vmatpush.bf16.msra.mxu0 %v151
    %167 = vmatpush.bf16.msra.mxu0 %v150
    %168 = vmatpush.bf16.msra.mxu0 %v149
    %169 = vmatpush.bf16.msra.mxu0 %v148
    %170 = vmatpush.bf16.msra.mxu0 %v147
    %171 = vmatmul.bf16.gmra.mxu0 %v107
    %v172 = vpop.f32.mrf.mxu0
    %v173 = vadd.f32 0.0, %v172
    %v174 = vpop.f32.mrf.mxu0
    %v175 = vadd.f32 0.0, %v174
    %176 = vmatmul.bf16.gmra.mxu0 %v108
    %v177 = vpop.f32.mrf.mxu0
    %v178 = vadd.f32 0.0, %v177
    %v179 = vpop.f32.mrf.mxu0
    %v180 = vadd.f32 0.0, %v179
    %181 = vmatmul.bf16.gmra.mxu0 %v109
    %v182 = vpop.f32.mrf.mxu0
    %v183 = vadd.f32 0.0, %v182
    %v184 = vpop.f32.mrf.mxu0
    %v185 = vadd.f32 0.0, %v184
    %186 = vmatmul.bf16.gmra.mxu0 %v110
    %v187 = vpop.f32.mrf.mxu0
    %v188 = vadd.f32 0.0, %v187
    %v189 = vpop.f32.mrf.mxu0
    %v190 = vadd.f32 0.0, %v189
    %191 = vdwg.mxu0
    %v192 = vpack.c.bf16 %v175, %v173
    %v193 = vpack.c.bf16 %v180, %v178
    %v194 = vpack.c.bf16 %v185, %v183
    %v195 = vpack.c.bf16 %v190, %v188
    %v212 = vunpack.c.l.b16 %v74
    %v213 = vunpack.c.l.b16 %v75
    %v214 = vunpack.c.l.b16 %v76
    %v215 = vunpack.c.l.b16 %v77
    %v216 = vunpack.c.l.b16 %v78
    %v217 = vunpack.c.l.b16 %v79
    %v218 = vunpack.c.l.b16 %v80
    %v219 = vunpack.c.l.b16 %v81
    %v220 = vunpack.c.l.b16 %v82
    %v221 = vunpack.c.l.b16 %v83
    %v222 = vunpack.c.l.b16 %v84
    %v223 = vunpack.c.l.b16 %v85
    %v224 = vunpack.c.l.b16 %v86
    %v225 = vunpack.c.l.b16 %v87
    %v226 = vunpack.c.l.b16 %v88
    %v227 = vunpack.c.l.b16 %v89
    %v228 = vpack.c.b16 %v213, %v212
    %v229 = vpack.c.b16 %v215, %v214
    %v230 = vpack.c.b16 %v217, %v216
    %v231 = vpack.c.b16 %v219, %v218
    %v232 = vpack.c.b16 %v221, %v220
    %v233 = vpack.c.b16 %v223, %v222
    %v234 = vpack.c.b16 %v225, %v224
    %v235 = vpack.c.b16 %v227, %v226
    %244 = vmatpush.bf16.msra.mxu0 %v235
    %245 = vmatpush.bf16.msra.mxu0 %v234
    %246 = vmatpush.bf16.msra.mxu0 %v233
    %247 = vmatpush.bf16.msra.mxu0 %v232
    %248 = vmatpush.bf16.msra.mxu0 %v231
    %249 = vmatpush.bf16.msra.mxu0 %v230
    %250 = vmatpush.bf16.msra.mxu0 %v229
    %251 = vmatpush.bf16.msra.mxu0 %v228
    %252 = vmatmul.bf16.gmra.mxu0 %v107
    %v253 = vpop.f32.mrf.mxu0
    %v254 = vadd.f32 0.0, %v253
    %v255 = vpop.f32.mrf.mxu0
    %v256 = vadd.f32 0.0, %v255
    %257 = vmatmul.bf16.gmra.mxu0 %v108
    %v258 = vpop.f32.mrf.mxu0
    %v259 = vadd.f32 0.0, %v258
    %v260 = vpop.f32.mrf.mxu0
    %v261 = vadd.f32 0.0, %v260
    %262 = vdwg.mxu0
    %v267 = vunpack.c.l.b16 %v54
    %v268 = vunpack.c.l.b16 %v55
    %v269 = vunpack.c.l.b16 %v56
    %v270 = vunpack.c.l.b16 %v57
    %v271 = vpack.c.b16 %v268, %v267
    %v272 = vpack.c.b16 %v270, %v269
    %vm273 = vcmask 523264
    %v275 = vsel %vm273, %v271, 0
    %v278 = vsel %vm273, %v272, 0
    %280 = vmatpush.bf16.msra.mxu0 0
    %281 = vmatpush.bf16.msra.mxu0 0
    %282 = vmatpush.bf16.msra.mxu0 0
    %283 = vmatpush.bf16.msra.mxu0 0
    %284 = vmatpush.bf16.msra.mxu0 %v195
    %285 = vmatpush.bf16.msra.mxu0 %v194
    %286 = vmatpush.bf16.msra.mxu0 %v193
    %287 = vmatpush.bf16.msra.mxu0 %v192
    %288 = vmatmul.bf16.gmra.mxu0 %v275
    %v289 = vpop.f32.mrf.mxu0
    %v290 = vadd.f32 %v254, %v289
    %v291 = vpop.f32.mrf.mxu0
    %v292 = vadd.f32 %v256, %v291
    %293 = vmatmul.bf16.gmra.mxu0 %v278
    %v294 = vpop.f32.mrf.mxu0
    %v295 = vadd.f32 %v259, %v294
    %v296 = vpop.f32.mrf.mxu0
    %v297 = vadd.f32 %v261, %v296
    %298 = vdwg.mxu0
    %v300 = vperm.slane %v90, 0
    %v302 = vadd.f32 %v290, %v300
    %v303 = vadd.f32 %v292, %v300
    %v304 = vadd.f32 %v295, %v300
    %v305 = vadd.f32 %v297, %v300
    %v306 = vmax.f32 %v302, 0.0
    %v307 = vmax.f32 %v303, 0.0
    %v308 = vmax.f32 %v304, 0.0
    %v309 = vmax.f32 %v305, 0.0
    %v310 = vld [vmem:[%s2] sm:$0xf]
    %v311 = vld [vmem:[%s2 + $0x4] sm:$0xf]
    %v312 = vpack.c.bf16 %v306, %v306
    %v313 = vpack.c.bf16 %v307, %v307
    %v314 = vpack.c.bf16 %v308, %v308
    %v315 = vpack.c.bf16 %v309, %v309
    %v316 = vld [vmem:[%s7] sm:$0xf]
    %v317 = vld [vmem:[%s7 + $0x4] sm:$0xf]
    %v318 = vld [vmem:[%s7 + $0x8] sm:$0xf]
    %v319 = vld [vmem:[%s7 + $0xc] sm:$0xf]
    %v320 = vld [vmem:[%s7 + $0x10] sm:$0xf]
    %v321 = vld [vmem:[%s7 + $0x14] sm:$0xf]
    %v322 = vld [vmem:[%s7 + $0x18] sm:$0xf]
    %v323 = vld [vmem:[%s7 + $0x1c] sm:$0xf]
    %v324 = vld [vmem:[%s7 + $0x20] sm:$0xf]
    %v325 = vld [vmem:[%s7 + $0x24] sm:$0xf]
    %v326 = vld [vmem:[%s7 + $0x28] sm:$0xf]
    %v327 = vld [vmem:[%s7 + $0x2c] sm:$0xf]
    %v328 = vld [vmem:[%s7 + $0x30] sm:$0xf]
    %v329 = vld [vmem:[%s7 + $0x34] sm:$0xf]
    %v330 = vld [vmem:[%s7 + $0x38] sm:$0xf]
    %v331 = vld [vmem:[%s7 + $0x3c] sm:$0xf]
    %v332 = vld [vmem:[%s8] sm:$0xf]
    %v333 = vld [vmem:[%s8 + $0x4] sm:$0xf]
    %v334 = vld [vmem:[%s8 + $0x8] sm:$0xf]
    %v335 = vld [vmem:[%s8 + $0xc] sm:$0xf]
    %v336 = vld [vmem:[%s8 + $0x10] sm:$0xf]
    %v337 = vld [vmem:[%s8 + $0x14] sm:$0xf]
    %v338 = vld [vmem:[%s8 + $0x18] sm:$0xf]
    %v339 = vld [vmem:[%s8 + $0x1c] sm:$0xf]
    %v340 = vld [vmem:[%s8 + $0x20] sm:$0xf]
    %v341 = vld [vmem:[%s8 + $0x24] sm:$0xf]
    %v342 = vld [vmem:[%s8 + $0x28] sm:$0xf]
    %v343 = vld [vmem:[%s8 + $0x2c] sm:$0xf]
    %v344 = vld [vmem:[%s8 + $0x30] sm:$0xf]
    %v345 = vld [vmem:[%s8 + $0x34] sm:$0xf]
    %v346 = vld [vmem:[%s8 + $0x38] sm:$0xf]
    %v347 = vld [vmem:[%s8 + $0x3c] sm:$0xf]
    %v348 = vld [vmem:[%s9] sm:$0x1]
    %v353 = vunpack.c.l.b16 %v312
    %v354 = vunpack.c.l.b16 %v313
    %v355 = vunpack.c.l.b16 %v314
    %v356 = vunpack.c.l.b16 %v315
    %v357 = vpack.c.b16 %v354, %v353
    %v358 = vpack.c.b16 %v356, %v355
    %v377 = vunpack.c.l.b16 %v316
    %v378 = vunpack.c.l.b16 %v317
    %v379 = vunpack.c.l.b16 %v318
    %v380 = vunpack.c.l.b16 %v319
    %v381 = vunpack.c.l.b16 %v320
    %v382 = vunpack.c.l.b16 %v321
    %v383 = vunpack.c.l.b16 %v322
    %v384 = vunpack.c.l.b16 %v323
    %v385 = vunpack.c.l.b16 %v324
    %v386 = vunpack.c.l.b16 %v325
    %v387 = vunpack.c.l.b16 %v326
    %v388 = vunpack.c.l.b16 %v327
    %v389 = vunpack.c.l.b16 %v328
    %v390 = vunpack.c.l.b16 %v329
    %v391 = vunpack.c.l.b16 %v330
    %v392 = vunpack.c.l.b16 %v331
    %v393 = vpack.c.b16 %v378, %v377
    %v394 = vpack.c.b16 %v380, %v379
    %v395 = vpack.c.b16 %v382, %v381
    %v396 = vpack.c.b16 %v384, %v383
    %v397 = vpack.c.b16 %v386, %v385
    %v398 = vpack.c.b16 %v388, %v387
    %v399 = vpack.c.b16 %v390, %v389
    %v400 = vpack.c.b16 %v392, %v391
    %409 = vmatpush.bf16.msra.mxu0 %v400
    %410 = vmatpush.bf16.msra.mxu0 %v399
    %411 = vmatpush.bf16.msra.mxu0 %v398
    %412 = vmatpush.bf16.msra.mxu0 %v397
    %413 = vmatpush.bf16.msra.mxu0 %v396
    %414 = vmatpush.bf16.msra.mxu0 %v395
    %415 = vmatpush.bf16.msra.mxu0 %v394
    %416 = vmatpush.bf16.msra.mxu0 %v393
    %417 = vmatmul.bf16.gmra.mxu0 %v357
    %v418 = vpop.f32.mrf.mxu0
    %v419 = vadd.f32 0.0, %v418
    %v420 = vpop.f32.mrf.mxu0
    %v421 = vadd.f32 0.0, %v420
    %422 = vmatmul.bf16.gmra.mxu0 %v358
    %v423 = vpop.f32.mrf.mxu0
    %v424 = vadd.f32 0.0, %v423
    %v425 = vpop.f32.mrf.mxu0
    %v426 = vadd.f32 0.0, %v425
    %427 = vdwg.mxu0
    %v428 = vpack.c.bf16 %v421, %v419
    %v429 = vpack.c.bf16 %v426, %v424
    %v446 = vunpack.c.l.b16 %v332
    %v447 = vunpack.c.l.b16 %v333
    %v448 = vunpack.c.l.b16 %v334
    %v449 = vunpack.c.l.b16 %v335
    %v450 = vunpack.c.l.b16 %v336
    %v451 = vunpack.c.l.b16 %v337
    %v452 = vunpack.c.l.b16 %v338
    %v453 = vunpack.c.l.b16 %v339
    %v454 = vunpack.c.l.b16 %v340
    %v455 = vunpack.c.l.b16 %v341
    %v456 = vunpack.c.l.b16 %v342
    %v457 = vunpack.c.l.b16 %v343
    %v458 = vunpack.c.l.b16 %v344
    %v459 = vunpack.c.l.b16 %v345
    %v460 = vunpack.c.l.b16 %v346
    %v461 = vunpack.c.l.b16 %v347
    %v462 = vpack.c.b16 %v447, %v446
    %v463 = vpack.c.b16 %v449, %v448
    %v464 = vpack.c.b16 %v451, %v450
    %v465 = vpack.c.b16 %v453, %v452
    %v466 = vpack.c.b16 %v455, %v454
    %v467 = vpack.c.b16 %v457, %v456
    %v468 = vpack.c.b16 %v459, %v458
    %v469 = vpack.c.b16 %v461, %v460
    %478 = vmatpush.bf16.msra.mxu0 %v469
    %479 = vmatpush.bf16.msra.mxu0 %v468
    %480 = vmatpush.bf16.msra.mxu0 %v467
    %481 = vmatpush.bf16.msra.mxu0 %v466
    %482 = vmatpush.bf16.msra.mxu0 %v465
    %483 = vmatpush.bf16.msra.mxu0 %v464
    %484 = vmatpush.bf16.msra.mxu0 %v463
    %485 = vmatpush.bf16.msra.mxu0 %v462
    %486 = vmatmul.bf16.gmra.mxu0 %v357
    %v487 = vpop.f32.mrf.mxu0
    %v488 = vadd.f32 0.0, %v487
    %v489 = vpop.f32.mrf.mxu0
    %v490 = vadd.f32 0.0, %v489
    %491 = vdwg.mxu0
    %v494 = vunpack.c.l.b16 %v310
    %v495 = vunpack.c.l.b16 %v311
    %v496 = vpack.c.b16 %v495, %v494
    %vm497 = vcmask 261120
    %v499 = vsel %vm497, %v496, 0
    %501 = vmatpush.bf16.msra.mxu0 0
    %502 = vmatpush.bf16.msra.mxu0 0
    %503 = vmatpush.bf16.msra.mxu0 0
    %504 = vmatpush.bf16.msra.mxu0 0
    %505 = vmatpush.bf16.msra.mxu0 0
    %506 = vmatpush.bf16.msra.mxu0 0
    %507 = vmatpush.bf16.msra.mxu0 %v429
    %508 = vmatpush.bf16.msra.mxu0 %v428
    %509 = vmatmul.bf16.gmra.mxu0 %v499
    %v510 = vpop.f32.mrf.mxu0
    %v511 = vadd.f32 %v488, %v510
    %v512 = vpop.f32.mrf.mxu0
    %v513 = vadd.f32 %v490, %v512
    %514 = vdwg.mxu0
    %v516 = vperm.slane %v348, 0
    %v518 = vadd.f32 %v511, %v516
    %v519 = vadd.f32 %v513, %v516
    %v520 = vmax.f32 %v518, 0.0
    %v521 = vmax.f32 %v519, 0.0
    %v522 = vld [vmem:[%s3] sm:$0xf]
    %v523 = vpack.c.bf16 %v520, %v520
    %v524 = vpack.c.bf16 %v521, %v521
    %v525 = vld [vmem:[%s10] sm:$0xf]
    %v526 = vld [vmem:[%s10 + $0x4] sm:$0xf]
    %v527 = vld [vmem:[%s10 + $0x8] sm:$0xf]
    %v528 = vld [vmem:[%s10 + $0xc] sm:$0xf]
    %v529 = vld [vmem:[%s10 + $0x10] sm:$0xf]
    %v530 = vld [vmem:[%s10 + $0x14] sm:$0xf]
    %v531 = vld [vmem:[%s10 + $0x18] sm:$0xf]
    %v532 = vld [vmem:[%s10 + $0x1c] sm:$0xf]
    %v533 = vld [vmem:[%s10 + $0x20] sm:$0xf]
    %v534 = vld [vmem:[%s10 + $0x24] sm:$0xf]
    %v535 = vld [vmem:[%s10 + $0x28] sm:$0xf]
    %v536 = vld [vmem:[%s10 + $0x2c] sm:$0xf]
    %v537 = vld [vmem:[%s10 + $0x30] sm:$0xf]
    %v538 = vld [vmem:[%s10 + $0x34] sm:$0xf]
    %v539 = vld [vmem:[%s10 + $0x38] sm:$0xf]
    %v540 = vld [vmem:[%s10 + $0x3c] sm:$0xf]
    %v541 = vld [vmem:[%s11] sm:$0xf]
    %v542 = vld [vmem:[%s11 + $0x4] sm:$0xf]
    %v543 = vld [vmem:[%s11 + $0x8] sm:$0xf]
    %v544 = vld [vmem:[%s11 + $0xc] sm:$0xf]
    %v545 = vld [vmem:[%s11 + $0x10] sm:$0xf]
    %v546 = vld [vmem:[%s11 + $0x14] sm:$0xf]
    %v547 = vld [vmem:[%s11 + $0x18] sm:$0xf]
    %v548 = vld [vmem:[%s11 + $0x1c] sm:$0xf]
    %v549 = vld [vmem:[%s11 + $0x20] sm:$0xf]
    %v550 = vld [vmem:[%s11 + $0x24] sm:$0xf]
    %v551 = vld [vmem:[%s11 + $0x28] sm:$0xf]
    %v552 = vld [vmem:[%s11 + $0x2c] sm:$0xf]
    %v553 = vld [vmem:[%s11 + $0x30] sm:$0xf]
    %v554 = vld [vmem:[%s11 + $0x34] sm:$0xf]
    %v555 = vld [vmem:[%s11 + $0x38] sm:$0xf]
    %v556 = vld [vmem:[%s11 + $0x3c] sm:$0xf]
    %v557 = vld [vmem:[%s12] sm:$0x1]
    %v560 = vunpack.c.l.b16 %v523
    %v561 = vunpack.c.l.b16 %v524
    %v562 = vpack.c.b16 %v561, %v560
    %v580 = vunpack.c.l.b16 %v525
    %v581 = vunpack.c.l.b16 %v526
    %v582 = vunpack.c.l.b16 %v527
    %v583 = vunpack.c.l.b16 %v528
    %v584 = vunpack.c.l.b16 %v529
    %v585 = vunpack.c.l.b16 %v530
    %v586 = vunpack.c.l.b16 %v531
    %v587 = vunpack.c.l.b16 %v532
    %v588 = vunpack.c.l.b16 %v533
    %v589 = vunpack.c.l.b16 %v534
    %v590 = vunpack.c.l.b16 %v535
    %v591 = vunpack.c.l.b16 %v536
    %v592 = vunpack.c.l.b16 %v537
    %v593 = vunpack.c.l.b16 %v538
    %v594 = vunpack.c.l.b16 %v539
    %v595 = vunpack.c.l.b16 %v540
    %v596 = vpack.c.b16 %v581, %v580
    %v597 = vpack.c.b16 %v583, %v582
    %v598 = vpack.c.b16 %v585, %v584
    %v599 = vpack.c.b16 %v587, %v586
    %v600 = vpack.c.b16 %v589, %v588
    %v601 = vpack.c.b16 %v591, %v590
    %v602 = vpack.c.b16 %v593, %v592
    %v603 = vpack.c.b16 %v595, %v594
    %612 = vmatpush.bf16.msra.mxu0 %v603
    %613 = vmatpush.bf16.msra.mxu0 %v602
    %614 = vmatpush.bf16.msra.mxu0 %v601
    %615 = vmatpush.bf16.msra.mxu0 %v600
    %616 = vmatpush.bf16.msra.mxu0 %v599
    %617 = vmatpush.bf16.msra.mxu0 %v598
    %618 = vmatpush.bf16.msra.mxu0 %v597
    %619 = vmatpush.bf16.msra.mxu0 %v596
    %620 = vmatmul.bf16.gmra.mxu0 %v562
    %v621 = vpop.f32.mrf.mxu0
    %v622 = vadd.f32 0.0, %v621
    %v623 = vpop.f32.mrf.mxu0
    %v624 = vadd.f32 0.0, %v623
    %625 = vdwg.mxu0
    %v626 = vpack.c.bf16 %v624, %v622
    %v643 = vunpack.c.l.b16 %v541
    %v644 = vunpack.c.l.b16 %v542
    %v645 = vunpack.c.l.b16 %v543
    %v646 = vunpack.c.l.b16 %v544
    %v647 = vunpack.c.l.b16 %v545
    %v648 = vunpack.c.l.b16 %v546
    %v649 = vunpack.c.l.b16 %v547
    %v650 = vunpack.c.l.b16 %v548
    %v651 = vunpack.c.l.b16 %v549
    %v652 = vunpack.c.l.b16 %v550
    %v653 = vunpack.c.l.b16 %v551
    %v654 = vunpack.c.l.b16 %v552
    %v655 = vunpack.c.l.b16 %v553
    %v656 = vunpack.c.l.b16 %v554
    %v657 = vunpack.c.l.b16 %v555
    %v658 = vunpack.c.l.b16 %v556
    %v659 = vpack.c.b16 %v644, %v643
    %v660 = vpack.c.b16 %v646, %v645
    %v661 = vpack.c.b16 %v648, %v647
    %v662 = vpack.c.b16 %v650, %v649
    %v663 = vpack.c.b16 %v652, %v651
    %v664 = vpack.c.b16 %v654, %v653
    %v665 = vpack.c.b16 %v656, %v655
    %v666 = vpack.c.b16 %v658, %v657
    %675 = vmatpush.bf16.msra.mxu0 %v666
    %676 = vmatpush.bf16.msra.mxu0 %v665
    %677 = vmatpush.bf16.msra.mxu0 %v664
    %678 = vmatpush.bf16.msra.mxu0 %v663
    %679 = vmatpush.bf16.msra.mxu0 %v662
    %680 = vmatpush.bf16.msra.mxu0 %v661
    %681 = vmatpush.bf16.msra.mxu0 %v660
    %682 = vmatpush.bf16.msra.mxu0 %v659
    %683 = vmatmul.bf16.gmra.mxu0 %v523
    %v684 = vpop.f32.mrf.mxu0
    %v685 = vadd.f32 0.0, %v684
    %v686 = vpop.f32.mrf.mxu0
    %687 = vdwg.mxu0
    %vm688 = vcmask 130048
    %v690 = vsel %vm688, %v522, 0
    %692 = vmatpush.bf16.msra.mxu0 0
    %693 = vmatpush.bf16.msra.mxu0 0
    %694 = vmatpush.bf16.msra.mxu0 0
    %695 = vmatpush.bf16.msra.mxu0 0
    %696 = vmatpush.bf16.msra.mxu0 0
    %697 = vmatpush.bf16.msra.mxu0 0
    %698 = vmatpush.bf16.msra.mxu0 0
    %699 = vmatpush.bf16.msra.mxu0 %v626
    %700 = vmatmul.bf16.gmra.mxu0 %v690
    %v701 = vpop.f32.mrf.mxu0
    %v702 = vadd.f32 %v685, %v701
    %v703 = vpop.f32.mrf.mxu0
    %704 = vdwg.mxu0
    %v706 = vperm.slane %v557, 0
    %v708 = vadd.f32 %v702, %v706
    %709 = vst [vmem:[#allocation2] sm:$0xff] %v708
    // Predicated region
    $region54: #{sage_forward.1} parent=1 // pred_check
      _
    $region55: #{sage_forward.1} parent=1 // pred_check_branch
      %711 = sbr.rel (0) target = $region57
    $region56: #{sage_forward.1} parent=1 // pred_region
      %713 = vsyncadd [#allocation3], 0
      %s715 = sshll.u32 [#allocation2], 4
      %s716 = int_to_ptr.vmem [resolvable:$true] %s715
      %s717 = sshll.u32 %s13, 4
      %s718 = int_to_ptr.hbm [resolvable:$true] %s717
      %720 = dma.vmem_to_hbm [thread:$0]  %s716, 128, %s718, [#allocation3]
    $region57: #{sage_forward.1} parent=1 // pred_fallthru
      _
    // Predicated region
    $region58: #{sage_forward.1} parent=1 // pred_check
      _
    $region59: #{sage_forward.1} parent=1 // pred_check_branch
      %722 = sbr.rel (0) target = $region61
    $region60: #{sage_forward.1} parent=1 // pred_region
      %724 = dma.done [#allocation3], 128
    $region61: #{sage_forward.1} parent=1 // pred_fallthru
      _
    %725 = vsyncpa [#allocation3], 1

</llo_original>
